<compile_context>
chip_gen: v7x
topology: tpu7x:2x2x1
jax: 0.10.0
libtpu: 0.0.40
codegen_flags: <defaults>
</compile_context>

<pallas_src>
import functools

import jax
import jax.numpy as jnp
from jax.experimental import pallas as pl
from jax.experimental.pallas import tpu as pltpu

LANE = 128      # lane width: hidden / action dims padded to a multiple of this
SUBLANE = 8     # f32 sublane: batch tile (and small obs dim) aligned to this
MAX_TB = 2048   # batch-tile cap; per-step blocks stay ~1-2 MiB, far below VMEM


def _round_up(n, m):
    return ((n + m - 1) // m) * m


def _cdiv(a, b):
    return -(-a // b)


def _pad2d(a, rows, cols, dtype=None):
    out = jnp.pad(a, ((0, rows - a.shape[0]), (0, cols - a.shape[1])))
    return out if dtype is None else out.astype(dtype)


def _mlp_kernel(x_ref,
                w1_ref, b1_ref,
                w2_ref, b2_ref,
                w3_ref, b3_ref,
                w4_ref, b4_ref,
                o_ref):
    # x_ref is already bf16; matmuls run on the MXU in bf16 with f32
    # accumulation; bias-add / ReLU stay on the f32 VPU path.
    h = jnp.dot(x_ref[...], w1_ref[...],
                preferred_element_type=jnp.float32) + b1_ref[...]
    h = jnp.maximum(h, 0.0)

    h = jnp.dot(h.astype(jnp.bfloat16), w2_ref[...],
                preferred_element_type=jnp.float32) + b2_ref[...]
    h = jnp.maximum(h, 0.0)

    h = jnp.dot(h.astype(jnp.bfloat16), w3_ref[...],
                preferred_element_type=jnp.float32) + b3_ref[...]
    h = jnp.maximum(h, 0.0)

    out = jnp.dot(h.astype(jnp.bfloat16), w4_ref[...],
                  preferred_element_type=jnp.float32) + b4_ref[...]
    # Lane-dense (multiple-of-128) store, bf16 -> half the writeback bytes.
    o_ref[...] = out.astype(o_ref.dtype)


def init_params(key, obs_size, hidden_size, n_actions):
    """Deterministic PyTorch-style init: U(-1/sqrt(fan_in), 1/sqrt(fan_in))."""
    dims = [(obs_size, hidden_size),
            (hidden_size, hidden_size),
            (hidden_size, hidden_size),
            (hidden_size, n_actions)]
    params = []
    for (fan_in, fan_out) in dims:
        key, kw, kb = jax.random.split(key, 3)
        bound = 1.0 / jnp.sqrt(jnp.float32(fan_in))
        w = jax.random.uniform(kw, (fan_in, fan_out), jnp.float32, -bound, bound)
        b = jax.random.uniform(kb, (1, fan_out), jnp.float32, -bound, bound)
        params.append((w, b))
    return params


def prepare_params(params, obs_size, hidden_size, n_actions):
    """Pad feature dims; weights -> bf16, biases stay f32.

    Hidden/action dims are padded to a multiple of 128 (lane-dense activations
    and output store). The first-layer K dim (obs) is only sublane-aligned (8)
    when obs < 128, so the dominant x-input DMA is not inflated 8x.
    Padded weight rows/cols and bias lanes are exactly zero, so padded lanes
    stay zero through every layer (ReLU(0)=0) and the wrapper slice is exact.
    """
    obs_p = _round_up(obs_size, LANE if obs_size >= LANE else SUBLANE)
    hid_p = _round_up(hidden_size, LANE)
    act_p = _round_up(n_actions, LANE)
    in_dims = [obs_p, hid_p, hid_p, hid_p]
    out_dims = [hid_p, hid_p, hid_p, act_p]

    padded = []
    for (w, b), di, do in zip(params, in_dims, out_dims):
        w_p = _pad2d(w, di, do, jnp.bfloat16)   # padded rows/cols are 0
        b_p = _pad2d(b, 1, do, jnp.float32)     # padded cols are 0
        padded.append((w_p, b_p))

    return {
        "layers": padded,
        "obs_size": obs_size, "hidden_size": hidden_size, "n_actions": n_actions,
        "obs_p": obs_p, "hid_p": hid_p, "act_p": act_p,
    }


@functools.partial(jax.jit, static_argnames=("tb",))
def _run_kernel(x_pad, w1, b1, w2, b2, w3, b3, w4, b4, *, tb):
    batch_p, obs_p = x_pad.shape
    hid_p = w1.shape[1]
    act_p = w4.shape[1]
    grid = (batch_p // tb,)

    const = lambda i: (0, 0)        # weights/biases: VMEM-resident across tiles
    tiled = lambda i: (i, 0)        # x / out: tiled along the batch axis

    flops = 2 * batch_p * (obs_p * hid_p + 2 * hid_p * hid_p + hid_p * act_p)
    bytes_accessed = (
        batch_p * obs_p * 2 + batch_p * act_p * 2            # bf16 x in / out
        + (w1.size + w2.size + w3.size + w4.size) * 2        # bf16 weights
        + (b1.size + b2.size + b3.size + b4.size) * 4        # f32 biases
    )

    return pl.pallas_call(
        _mlp_kernel,
        out_shape=jax.ShapeDtypeStruct((batch_p, act_p), jnp.bfloat16),
        grid_spec=pltpu.PrefetchScalarGridSpec(
            num_scalar_prefetch=0,
            grid=grid,
            in_specs=[
                pl.BlockSpec((tb, obs_p), tiled),
                pl.BlockSpec((obs_p, hid_p), const),
                pl.BlockSpec((1, hid_p), const),
                pl.BlockSpec((hid_p, hid_p), const),
                pl.BlockSpec((1, hid_p), const),
                pl.BlockSpec((hid_p, hid_p), const),
                pl.BlockSpec((1, hid_p), const),
                pl.BlockSpec((hid_p, act_p), const),
                pl.BlockSpec((1, act_p), const),
            ],
            out_specs=pl.BlockSpec((tb, act_p), tiled),
        ),
        compiler_params=pltpu.CompilerParams(
            dimension_semantics=("parallel",),       # batch tiles shard on v7x
            vmem_limit_bytes=32 * 1024 * 1024,       # raises v5e's 16 MiB default
        ),
        cost_estimate=pl.CostEstimate(
            flops=flops, transcendentals=0, bytes_accessed=bytes_accessed),
    )(x_pad, w1, b1, w2, b2, w3, b3, w4, b4)


def net_forward(x, prep):
    """Mirrors Net.forward: flatten to 2D (batch, -1); 1D input -> 1D output."""
    x = jnp.asarray(x, jnp.float32)
    squeeze = x.ndim == 1
    x2 = x.reshape(1, -1) if squeeze else x.reshape(x.shape[0], -1)

    batch = x2.shape[0]
    obs_p = prep["obs_p"]
    n_actions = prep["n_actions"]

    # Even batch split: at least 2 tiles (so both v7x TensorCores get work on
    # mid-size batches), more once batch exceeds MAX_TB; tiles are multiples
    # of 8 rows.  Tiny batches collapse back to a single tile naturally.
    n_tiles = max(_cdiv(batch, MAX_TB), 2)
    tb = _round_up(_cdiv(batch, n_tiles), SUBLANE)
    batch_p = _round_up(batch, tb)

    # Pad rows with zeros and cast straight to bf16: the pad already
    # materializes a copy, so the cast is free and halves the x-input DMA.
    x_pad = _pad2d(x2, batch_p, obs_p, jnp.bfloat16)

    (w1, b1), (w2, b2), (w3, b3), (w4, b4) = prep["layers"]
    out = _run_kernel(x_pad, w1, b1, w2, b2, w3, b3, w4, b4, tb=tb)

    out = out[:batch, :n_actions].astype(jnp.float32)
    if squeeze:
        out = out.reshape(-1)
    return out


def _reference(x, params):
    """Same math (bf16 matmul inputs, f32 accumulation, bf16 output), plain XLA.

    Note: a pure-f32 PyTorch forward would differ at ~1e-2 relative for large
    hidden sizes; the bf16 matmul-input / bf16-output choice is intentional.
    """
    x = jnp.asarray(x, jnp.float32)
    x = x.reshape(x.shape[0], -1) if x.ndim > 1 else x.reshape(1, -1)

    def layer(h, w, b, relu):
        h = jnp.dot(h.astype(jnp.bfloat16), w.astype(jnp.bfloat16),
                    preferred_element_type=jnp.float32) + b
        return jnp.maximum(h, 0.0) if relu else h

    (w1, b1), (w2, b2), (w3, b3), (w4, b4) = params
    h = layer(x, w1, b1, True)
    h = layer(h, w2, b2, True)
    h = layer(h, w3, b3, True)
    out = layer(h, w4, b4, False)
    # Kernel writes its output block in bf16; mirror that here.
    return out.astype(jnp.bfloat16).astype(jnp.float32)


if __name__ == "__main__":
    obs_size, hidden_size, n_actions = 16, 32, 4
    batch = 8

    key = jax.random.PRNGKey(0)
    key, kx = jax.random.split(key)
    params = init_params(key, obs_size, hidden_size, n_actions)
    prep = prepare_params(params, obs_size, hidden_size, n_actions)

    # 2-D batch path.
    x = jax.random.normal(kx, (batch, obs_size), jnp.float32)
    out = net_forward(x, prep)
    jax.block_until_ready(out)
    ref = _reference(x, params)
    assert out.shape == (batch, n_actions), out.shape
    assert jnp.allclose(out, ref, atol=1e-3, rtol=1e-3), \
        float(jnp.max(jnp.abs(out - ref)))

    # 1-D (single observation) path, like the PyTorch module.
    x1 = jax.random.normal(kx, (obs_size,), jnp.float32)
    out1 = net_forward(x1, prep)
    jax.block_until_ready(out1)
    ref1 = _reference(x1, params).reshape(-1)
    assert out1.shape == (n_actions,)
    assert jnp.allclose(out1, ref1, atol=1e-3, rtol=1e-3)

    # Multi-tile grid path (batch=20 -> 2 tiles of 16 rows).
    key, kx2 = jax.random.split(key)
    x3 = jax.random.normal(kx2, (20, obs_size), jnp.float32)
    out3 = net_forward(x3, prep)
    jax.block_until_ready(out3)
    ref3 = _reference(x3, params)
    assert out3.shape == (20, n_actions)
    assert jnp.allclose(out3, ref3, atol=1e-3, rtol=1e-3)

    print("KERNEL_OK")
</pallas_src>

<mosaic_0001>
module attributes {stable_mosaic.version = 11 : i64} {
  func.func @_mlp_kernel(%arg0: i32, %arg1: memref<8x16xbf16, #tpu.memory_space<vmem>>, %arg2: memref<16x128xbf16, #tpu.memory_space<vmem>>, %arg3: memref<1x128xf32, #tpu.memory_space<vmem>>, %arg4: memref<128x128xbf16, #tpu.memory_space<vmem>>, %arg5: memref<1x128xf32, #tpu.memory_space<vmem>>, %arg6: memref<128x128xbf16, #tpu.memory_space<vmem>>, %arg7: memref<1x128xf32, #tpu.memory_space<vmem>>, %arg8: memref<128x128xbf16, #tpu.memory_space<vmem>>, %arg9: memref<1x128xf32, #tpu.memory_space<vmem>>, %arg10: memref<8x128xbf16, #tpu.memory_space<vmem>>) attributes {dimension_semantics = [#tpu.dimension_semantics<parallel>], iteration_bounds = array<i64: 1>, scalar_prefetch = 0 : i64, scratch_operands = 0 : i64, tpu.core_type = #tpu.core_type<tc>, window_params = [{transform_indices = @transform_0, window_bounds = array<i64: 8, 16>}, {pipeline_mode = #tpu.pipeline_mode<synchronous>, transform_indices = @transform_1, window_bounds = array<i64: 16, 128>}, {pipeline_mode = #tpu.pipeline_mode<synchronous>, transform_indices = @transform_2, window_bounds = array<i64: 1, 128>}, {pipeline_mode = #tpu.pipeline_mode<synchronous>, transform_indices = @transform_3, window_bounds = array<i64: 128, 128>}, {pipeline_mode = #tpu.pipeline_mode<synchronous>, transform_indices = @transform_4, window_bounds = array<i64: 1, 128>}, {pipeline_mode = #tpu.pipeline_mode<synchronous>, transform_indices = @transform_5, window_bounds = array<i64: 128, 128>}, {pipeline_mode = #tpu.pipeline_mode<synchronous>, transform_indices = @transform_6, window_bounds = array<i64: 1, 128>}, {pipeline_mode = #tpu.pipeline_mode<synchronous>, transform_indices = @transform_7, window_bounds = array<i64: 128, 128>}, {pipeline_mode = #tpu.pipeline_mode<synchronous>, transform_indices = @transform_8, window_bounds = array<i64: 1, 128>}, {transform_indices = @transform_9, window_bounds = array<i64: 8, 128>}]} {
    %c0 = arith.constant 0 : index
    %c0_0 = arith.constant 0 : index
    %0 = vector.load %arg1[%c0, %c0_0] : memref<8x16xbf16, #tpu.memory_space<vmem>>, vector<8x16xbf16>
    %c0_1 = arith.constant 0 : index
    %c0_2 = arith.constant 0 : index
    %1 = vector.load %arg2[%c0_1, %c0_2] : memref<16x128xbf16, #tpu.memory_space<vmem>>, vector<16x128xbf16>
    %cst = arith.constant dense<0.000000e+00> : vector<8x128xf32>
    %2 = tpu.matmul %0, %1, %cst {dimension_numbers = #tpu.dot_dimension_numbers<[1], [0], [0], [1], [0, 0, 1, 1], [], []>} : vector<8x16xbf16>, vector<16x128xbf16>, vector<8x128xf32> -> vector<8x128xf32>
    %c0_3 = arith.constant 0 : index
    %c0_4 = arith.constant 0 : index
    %3 = vector.load %arg3[%c0_3, %c0_4] : memref<1x128xf32, #tpu.memory_space<vmem>>, vector<1x128xf32>
    %4 = vector.broadcast %3 : vector<1x128xf32> to vector<8x128xf32>
    %5 = arith.addf %2, %4 : vector<8x128xf32>
    %cst_5 = arith.constant 0.000000e+00 : f32
    %6 = vector.broadcast %cst_5 : f32 to vector<8x128xf32>
    %7 = arith.maximumf %5, %6 : vector<8x128xf32>
    %8 = arith.truncf %7 : vector<8x128xf32> to vector<8x128xbf16>
    %c0_6 = arith.constant 0 : index
    %c0_7 = arith.constant 0 : index
    %9 = vector.load %arg4[%c0_6, %c0_7] : memref<128x128xbf16, #tpu.memory_space<vmem>>, vector<128x128xbf16>
    %cst_8 = arith.constant dense<0.000000e+00> : vector<8x128xf32>
    %10 = tpu.matmul %8, %9, %cst_8 {dimension_numbers = #tpu.dot_dimension_numbers<[1], [0], [0], [1], [0, 0, 1, 1], [], []>} : vector<8x128xbf16>, vector<128x128xbf16>, vector<8x128xf32> -> vector<8x128xf32>
    %c0_9 = arith.constant 0 : index
    %c0_10 = arith.constant 0 : index
    %11 = vector.load %arg5[%c0_9, %c0_10] : memref<1x128xf32, #tpu.memory_space<vmem>>, vector<1x128xf32>
    %12 = vector.broadcast %11 : vector<1x128xf32> to vector<8x128xf32>
    %13 = arith.addf %10, %12 : vector<8x128xf32>
    %cst_11 = arith.constant 0.000000e+00 : f32
    %14 = vector.broadcast %cst_11 : f32 to vector<8x128xf32>
    %15 = arith.maximumf %13, %14 : vector<8x128xf32>
    %16 = arith.truncf %15 : vector<8x128xf32> to vector<8x128xbf16>
    %c0_12 = arith.constant 0 : index
    %c0_13 = arith.constant 0 : index
    %17 = vector.load %arg6[%c0_12, %c0_13] : memref<128x128xbf16, #tpu.memory_space<vmem>>, vector<128x128xbf16>
    %cst_14 = arith.constant dense<0.000000e+00> : vector<8x128xf32>
    %18 = tpu.matmul %16, %17, %cst_14 {dimension_numbers = #tpu.dot_dimension_numbers<[1], [0], [0], [1], [0, 0, 1, 1], [], []>} : vector<8x128xbf16>, vector<128x128xbf16>, vector<8x128xf32> -> vector<8x128xf32>
    %c0_15 = arith.constant 0 : index
    %c0_16 = arith.constant 0 : index
    %19 = vector.load %arg7[%c0_15, %c0_16] : memref<1x128xf32, #tpu.memory_space<vmem>>, vector<1x128xf32>
    %20 = vector.broadcast %19 : vector<1x128xf32> to vector<8x128xf32>
    %21 = arith.addf %18, %20 : vector<8x128xf32>
    %cst_17 = arith.constant 0.000000e+00 : f32
    %22 = vector.broadcast %cst_17 : f32 to vector<8x128xf32>
    %23 = arith.maximumf %21, %22 : vector<8x128xf32>
    %24 = arith.truncf %23 : vector<8x128xf32> to vector<8x128xbf16>
    %c0_18 = arith.constant 0 : index
    %c0_19 = arith.constant 0 : index
    %25 = vector.load %arg8[%c0_18, %c0_19] : memref<128x128xbf16, #tpu.memory_space<vmem>>, vector<128x128xbf16>
    %cst_20 = arith.constant dense<0.000000e+00> : vector<8x128xf32>
    %26 = tpu.matmul %24, %25, %cst_20 {dimension_numbers = #tpu.dot_dimension_numbers<[1], [0], [0], [1], [0, 0, 1, 1], [], []>} : vector<8x128xbf16>, vector<128x128xbf16>, vector<8x128xf32> -> vector<8x128xf32>
    %c0_21 = arith.constant 0 : index
    %c0_22 = arith.constant 0 : index
    %27 = vector.load %arg9[%c0_21, %c0_22] : memref<1x128xf32, #tpu.memory_space<vmem>>, vector<1x128xf32>
    %28 = vector.broadcast %27 : vector<1x128xf32> to vector<8x128xf32>
    %29 = arith.addf %26, %28 : vector<8x128xf32>
    %30 = arith.truncf %29 : vector<8x128xf32> to vector<8x128xbf16>
    %c0_23 = arith.constant 0 : index
    %c0_24 = arith.constant 0 : index
    %31 = vector.load %arg10[%c0_23, %c0_24] : memref<8x128xbf16, #tpu.memory_space<vmem>>, vector<8x128xbf16>
    tpu.vector_store %arg10[%c0_23, %c0_24], %30 {strides = array<i32>} : memref<8x128xbf16, #tpu.memory_space<vmem>>, vector<8x128xbf16>,
    return
  }
  func.func @transform_0(%arg0: i32) -> (i32, i32) {
    %c0_i32 = arith.constant 0 : i32
    %c0_i32_0 = arith.constant 0 : i32
    return %arg0, %c0_i32 : i32, i32
  }
  func.func @transform_1(%arg0: i32) -> (i32, i32) {
    %c0_i32 = arith.constant 0 : i32
    %c0_i32_0 = arith.constant 0 : i32
    %c0_i32_1 = arith.constant 0 : i32
    return %c0_i32, %c0_i32_0 : i32, i32
  }
  func.func @transform_2(%arg0: i32) -> (i32, i32) {
    %c0_i32 = arith.constant 0 : i32
    %c0_i32_0 = arith.constant 0 : i32
    %c0_i32_1 = arith.constant 0 : i32
    return %c0_i32, %c0_i32_0 : i32, i32
  }
  func.func @transform_3(%arg0: i32) -> (i32, i32) {
    %c0_i32 = arith.constant 0 : i32
    %c0_i32_0 = arith.constant 0 : i32
    %c0_i32_1 = arith.constant 0 : i32
    return %c0_i32, %c0_i32_0 : i32, i32
  }
  func.func @transform_4(%arg0: i32) -> (i32, i32) {
    %c0_i32 = arith.constant 0 : i32
    %c0_i32_0 = arith.constant 0 : i32
    %c0_i32_1 = arith.constant 0 : i32
    return %c0_i32, %c0_i32_0 : i32, i32
  }
  func.func @transform_5(%arg0: i32) -> (i32, i32) {
    %c0_i32 = arith.constant 0 : i32
    %c0_i32_0 = arith.constant 0 : i32
    %c0_i32_1 = arith.constant 0 : i32
    return %c0_i32, %c0_i32_0 : i32, i32
  }
  func.func @transform_6(%arg0: i32) -> (i32, i32) {
    %c0_i32 = arith.constant 0 : i32
    %c0_i32_0 = arith.constant 0 : i32
    %c0_i32_1 = arith.constant 0 : i32
    return %c0_i32, %c0_i32_0 : i32, i32
  }
  func.func @transform_7(%arg0: i32) -> (i32, i32) {
    %c0_i32 = arith.constant 0 : i32
    %c0_i32_0 = arith.constant 0 : i32
    %c0_i32_1 = arith.constant 0 : i32
    return %c0_i32, %c0_i32_0 : i32, i32
  }
  func.func @transform_8(%arg0: i32) -> (i32, i32) {
    %c0_i32 = arith.constant 0 : i32
    %c0_i32_0 = arith.constant 0 : i32
    %c0_i32_1 = arith.constant 0 : i32
    return %c0_i32, %c0_i32_0 : i32, i32
  }
  func.func @transform_9(%arg0: i32) -> (i32, i32) {
    %c0_i32 = arith.constant 0 : i32
    %c0_i32_0 = arith.constant 0 : i32
    return %arg0, %c0_i32 : i32, i32
  }
}

</mosaic_0001>

<llo_original>
// kernel: _run_kernel.1
$region0: #{_run_kernel.1}
  #allocation0 [shape = 'u32[]', space=smem, size = 0x4, offset = 0x4, fixed_abs, tag = 'smem constant byte address 0x4 - core index']
  #allocation1 [shape = 'u32[144,128]{1,0:T(1,128)}', space=vmem, size = 0x12000, scoped, tag = 'internal scratch']
  %s0 = inlined_call_operand.hbm [shape: bf16[8,16], index: 0, kind: input, shape index: {}]
  %s1 = inlined_call_operand.hbm [shape: bf16[16,128], index: 1, kind: input, shape index: {}]
  %s2 = inlined_call_operand.vmem [shape: f32[1,128], index: 2, kind: input, shape index: {}]
  %s3 = inlined_call_operand.hbm [shape: bf16[128,128], index: 3, kind: input, shape index: {}]
  %s4 = inlined_call_operand.vmem [shape: f32[1,128], index: 4, kind: input, shape index: {}]
  %s5 = inlined_call_operand.hbm [shape: bf16[128,128], index: 5, kind: input, shape index: {}]
  %s6 = inlined_call_operand.vmem [shape: f32[1,128], index: 6, kind: input, shape index: {}]
  %s7 = inlined_call_operand.hbm [shape: bf16[128,128], index: 7, kind: input, shape index: {}]
  %s8 = inlined_call_operand.vmem [shape: f32[1,128], index: 8, kind: input, shape index: {}]
  %s9 = inlined_call_operand.hbm [shape: bf16[8,128], index: 9, kind: output, shape index: {}]
  %s10 = sld [smem:[#allocation0]]
  $region66: #{_run_kernel.1} parent=0
    _
  %s12 = ssub.s32 1, %s10
  %s13 = scalar_select 0, %s12, %s10
  $region1: #{_run_kernel.1} parent=0
    #allocation2 [shape = 'u8[2048]{0}', space=vmem, size = 0x800, scoped, tag = 'input window, operand 0, single buffered']
    #allocation3 [shape = 's32[1]{0}', space=sflag, size = 0x4, scoped, tag = 'scoped memory for _run_kernel.1']
    #allocation4 [shape = 's32[1]{0}', space=sflag, size = 0x4, scoped, tag = 'scoped memory for _run_kernel.1']
    #allocation5 [shape = 'u8[4096]{0}', space=vmem, size = 0x1000, scoped, tag = 'input window, operand 1, single buffered']
    #allocation6 [shape = 's32[1]{0}', space=sflag, size = 0x4, scoped, tag = 'scoped memory for _run_kernel.1']
    #allocation7 [shape = 'u8[32768]{0}', space=vmem, size = 0x8000, scoped, tag = 'input window, operand 3, single buffered']
    #allocation8 [shape = 'u8[32768]{0}', space=vmem, size = 0x8000, scoped, tag = 'input window, operand 5, single buffered']
    #allocation9 [shape = 's32[1]{0}', space=sflag, size = 0x4, scoped, tag = 'scoped memory for _run_kernel.1']
    #allocation10 [shape = 'u8[32768]{0}', space=vmem, size = 0x8000, scoped, tag = 'input window, operand 7, single buffered']
    #allocation11 [shape = 'u8[2048]{0}', space=vmem, size = 0x800, scoped, tag = 'output window, operand 0, single buffered']
    %14 = vsyncpa [#allocation3], 0
    %15 = vsyncpa [#allocation6], 0
    %16 = vsyncpa [#allocation9], 0
    %17 = vsyncpa [#allocation4], 0
    // Predicated region
    $region2: #{_run_kernel.1} parent=1 // pred_check
      _
    $region3: #{_run_kernel.1} parent=1 // pred_check_branch
      %19 = sbr.rel (0) target = $region5
    $region4: #{_run_kernel.1} parent=1 // pred_region
      %s21 = ssub.s32 64, 64
      %22 = vsyncadd [#allocation3], %s21
      %s24 = sshll.u32 [#allocation2], 4
      %s25 = int_to_ptr.vmem [resolvable:$true] %s24
      %27 = dma.hbm_to_vmem [thread:$0]  %s0, 64, %s25, [#allocation3]
    $region5: #{_run_kernel.1} parent=1 // pred_fallthru
      _
    // Predicated region
    $region6: #{_run_kernel.1} parent=1 // pred_check
      _
    $region7: #{_run_kernel.1} parent=1 // pred_check_branch
      %29 = sbr.rel (0) target = $region9
    $region8: #{_run_kernel.1} parent=1 // pred_region
      %s31 = ssub.s32 128, 128
      %32 = vsyncadd [#allocation6], %s31
      %s33 = sshll.u32 [#allocation5], 4
      %s34 = int_to_ptr.vmem [resolvable:$true] %s33
      %39 = dma.hbm_to_vmem [thread:$0]  %s1, 128, %s34, [#allocation6], 64, 64, 4
    $region9: #{_run_kernel.1} parent=1 // pred_fallthru
      _
    // Predicated region
    $region10: #{_run_kernel.1} parent=1 // pred_check
      _
    $region11: #{_run_kernel.1} parent=1 // pred_check_branch
      %41 = sbr.rel (0) target = $region13
    $region12: #{_run_kernel.1} parent=1 // pred_region
      _
    $region13: #{_run_kernel.1} parent=1 // pred_fallthru
      _
    // Predicated region
    $region14: #{_run_kernel.1} parent=1 // pred_check
      _
    $region15: #{_run_kernel.1} parent=1 // pred_check_branch
      %43 = sbr.rel (0) target = $region17
    $region16: #{_run_kernel.1} parent=1 // pred_region
      %s45 = ssub.s32 1024, 1024
      %46 = vsyncadd [#allocation6], %s45
      %s47 = sshll.u32 [#allocation7], 4
      %s48 = int_to_ptr.vmem [resolvable:$true] %s47
      %53 = dma.hbm_to_vmem [thread:$0]  %s3, 1024, %s48, [#allocation6], 64, 64, 4
    $region17: #{_run_kernel.1} parent=1 // pred_fallthru
      _
    // Predicated region
    $region18: #{_run_kernel.1} parent=1 // pred_check
      _
    $region19: #{_run_kernel.1} parent=1 // pred_check_branch
      %55 = sbr.rel (0) target = $region21
    $region20: #{_run_kernel.1} parent=1 // pred_region
      _
    $region21: #{_run_kernel.1} parent=1 // pred_fallthru
      _
    // Predicated region
    $region22: #{_run_kernel.1} parent=1 // pred_check
      _
    $region23: #{_run_kernel.1} parent=1 // pred_check_branch
      %57 = sbr.rel (0) target = $region25
    $region24: #{_run_kernel.1} parent=1 // pred_region
      %s59 = ssub.s32 1024, 1024
      %60 = vsyncadd [#allocation9], %s59
      %s61 = sshll.u32 [#allocation8], 4
      %s62 = int_to_ptr.vmem [resolvable:$true] %s61
      %67 = dma.hbm_to_vmem [thread:$0]  %s5, 1024, %s62, [#allocation9], 64, 64, 4
    $region25: #{_run_kernel.1} parent=1 // pred_fallthru
      _
    // Predicated region
    $region26: #{_run_kernel.1} parent=1 // pred_check
      _
    $region27: #{_run_kernel.1} parent=1 // pred_check_branch
      %69 = sbr.rel (0) target = $region29
    $region28: #{_run_kernel.1} parent=1 // pred_region
      _
    $region29: #{_run_kernel.1} parent=1 // pred_fallthru
      _
    // Predicated region
    $region30: #{_run_kernel.1} parent=1 // pred_check
      _
    $region31: #{_run_kernel.1} parent=1 // pred_check_branch
      %71 = sbr.rel (0) target = $region33
    $region32: #{_run_kernel.1} parent=1 // pred_region
      %s73 = ssub.s32 1024, 1024
      %74 = vsyncadd [#allocation9], %s73
      %s75 = sshll.u32 [#allocation10], 4
      %s76 = int_to_ptr.vmem [resolvable:$true] %s75
      %81 = dma.hbm_to_vmem [thread:$0]  %s7, 1024, %s76, [#allocation9], 64, 64, 4
    $region33: #{_run_kernel.1} parent=1 // pred_fallthru
      _
    // Predicated region
    $region34: #{_run_kernel.1} parent=1 // pred_check
      _
    $region35: #{_run_kernel.1} parent=1 // pred_check_branch
      %83 = sbr.rel (0) target = $region37
    $region36: #{_run_kernel.1} parent=1 // pred_region
      _
    $region37: #{_run_kernel.1} parent=1 // pred_fallthru
      _
    // Predicated region
    $region38: #{_run_kernel.1} parent=1 // pred_check
      _
    $region39: #{_run_kernel.1} parent=1 // pred_check_branch
      %85 = sbr.rel (0) target = $region41
    $region40: #{_run_kernel.1} parent=1 // pred_region
      %86 = dma.done [#allocation3], 64
    $region41: #{_run_kernel.1} parent=1 // pred_fallthru
      _
    // Predicated region
    $region42: #{_run_kernel.1} parent=1 // pred_check
      _
    $region43: #{_run_kernel.1} parent=1 // pred_check_branch
      %88 = sbr.rel (0) target = $region45
    $region44: #{_run_kernel.1} parent=1 // pred_region
      %89 = dma.done [#allocation6], 128
    $region45: #{_run_kernel.1} parent=1 // pred_fallthru
      _
    // Predicated region
    $region46: #{_run_kernel.1} parent=1 // pred_check
      _
    $region47: #{_run_kernel.1} parent=1 // pred_check_branch
      %91 = sbr.rel (0) target = $region49
    $region48: #{_run_kernel.1} parent=1 // pred_region
      %92 = dma.done [#allocation6], 1024
    $region49: #{_run_kernel.1} parent=1 // pred_fallthru
      _
    // Predicated region
    $region50: #{_run_kernel.1} parent=1 // pred_check
      _
    $region51: #{_run_kernel.1} parent=1 // pred_check_branch
      %94 = sbr.rel (0) target = $region53
    $region52: #{_run_kernel.1} parent=1 // pred_region
      %95 = dma.done [#allocation9], 1024
    $region53: #{_run_kernel.1} parent=1 // pred_fallthru
      _
    // Predicated region
    $region54: #{_run_kernel.1} parent=1 // pred_check
      _
    $region55: #{_run_kernel.1} parent=1 // pred_check_branch
      %97 = sbr.rel (0) target = $region57
    $region56: #{_run_kernel.1} parent=1 // pred_region
      %98 = dma.done [#allocation9], 1024
    $region57: #{_run_kernel.1} parent=1 // pred_fallthru
      _
    %v100 = vld [vmem:[#allocation2] sm:$0xf]
    %v101 = vld [vmem:[#allocation5] sm:$0xf]
    %v102 = vld [vmem:[#allocation5 + $0x4] sm:$0xf]
    %v103 = vld [vmem:[%s2] sm:$0x1]
    %v105 = vlaneseq
    %v106 = vshrl.u32 %v105, 7
    %v107 = vsub.s32 0, %v106
    %v108 = vrot.slane %v103, %v107
    %v112 = vunpack.c.l.b16 %v101
    %v113 = vunpack.c.l.b16 %v102
    %v114 = vpack.c.b16 %v113, %v112
    %vm116 = vcmask 130048
    %v118 = vsel %vm116, %v100, 0
    %120 = vmatprep.subr.bf16.mxu0 0
    %121 = vmatpush1.bf16.msra.mxu0 %v114
    %122 = vmatprep.subr.bf16.mxu0 0
    %123 = vmatpush1.bf16.msra.mxu0 0
    %124 = vmatprep.subr.bf16.mxu0 0
    %125 = vmatpush1.bf16.msra.mxu0 0
    %126 = vmatprep.subr.bf16.mxu0 0
    %127 = vmatpush1.bf16.msra.mxu0 0
    %128 = vmatprep.subr.bf16.mxu0 0
    %129 = vmatpush1.bf16.msra.mxu0 0
    %130 = vmatprep.subr.bf16.mxu0 0
    %131 = vmatpush1.bf16.msra.mxu0 0
    %132 = vmatprep.subr.bf16.mxu0 0
    %133 = vmatpush1.bf16.msra.mxu0 0
    %134 = vmatprep.subr.bf16.mxu0 0
    %135 = vmatpush1.bf16.msra.mxu0 0
    %136 = vmatprep.subr.bf16.mxu0 0
    %137 = vmatpush1.bf16.msra.mxu0 0
    %138 = vmatprep.subr.bf16.mxu0 0
    %139 = vmatpush1.bf16.msra.mxu0 0
    %140 = vmatprep.subr.bf16.mxu0 0
    %141 = vmatpush1.bf16.msra.mxu0 0
    %142 = vmatprep.subr.bf16.mxu0 0
    %143 = vmatpush1.bf16.msra.mxu0 0
    %144 = vmatprep.subr.bf16.mxu0 0
    %145 = vmatpush1.bf16.msra.mxu0 0
    %146 = vmatprep.subr.bf16.mxu0 0
    %147 = vmatpush1.bf16.msra.mxu0 0
    %148 = vmatprep.subr.bf16.mxu0 0
    %149 = vmatpush1.bf16.msra.mxu0 0
    %150 = vmatprep.subr.bf16.mxu0 0
    %151 = vmatpush1.bf16.msra.mxu0 0
    %152 = vmatprep.mubr.bf16.mxu0 0
    %153 = vmatmul.mubr.bf16.gmra.mrb[0].mxu0 %v118
    %v154 = vpop.f32.mrb[0].mxu0
    %v155 = vadd.f32 %v108, %v154
    %v156 = vpop.f32.mrb[0].mxu0
    %v157 = vpop.f32.mrb[0].mxu0
    %v158 = vpop.f32.mrb[0].mxu0
    %159 = vdwg.mxu0
    %v160 = vmax.f32 %v155, 0.0
    %v161 = vpack.c.bf16 %v160, %v160
    %v162 = vld [vmem:[#allocation7] sm:$0xf]
    %v163 = vld [vmem:[#allocation7 + $0x4] sm:$0xf]
    %v164 = vld [vmem:[#allocation7 + $0x8] sm:$0xf]
    %v165 = vld [vmem:[#allocation7 + $0xc] sm:$0xf]
    %v166 = vld [vmem:[#allocation7 + $0x10] sm:$0xf]
    %v167 = vld [vmem:[#allocation7 + $0x14] sm:$0xf]
    %v168 = vld [vmem:[#allocation7 + $0x18] sm:$0xf]
    %v169 = vld [vmem:[#allocation7 + $0x1c] sm:$0xf]
    %v170 = vld [vmem:[#allocation7 + $0x20] sm:$0xf]
    %v171 = vld [vmem:[#allocation7 + $0x24] sm:$0xf]
    %v172 = vld [vmem:[#allocation7 + $0x28] sm:$0xf]
    %v173 = vld [vmem:[#allocation7 + $0x2c] sm:$0xf]
    %v174 = vld [vmem:[#allocation7 + $0x30] sm:$0xf]
    %v175 = vld [vmem:[#allocation7 + $0x34] sm:$0xf]
    %v176 = vld [vmem:[#allocation7 + $0x38] sm:$0xf]
    %v177 = vld [vmem:[#allocation7 + $0x3c] sm:$0xf]
    %v178 = vld [vmem:[%s4] sm:$0x1]
    %v180 = vlaneseq
    %v181 = vshrl.u32 %v180, 7
    %v182 = vsub.s32 0, %v181
    %v183 = vrot.slane %v178, %v182
    %v201 = vunpack.c.l.b16 %v162
    %v202 = vunpack.c.l.b16 %v163
    %v203 = vunpack.c.l.b16 %v164
    %v204 = vunpack.c.l.b16 %v165
    %v205 = vunpack.c.l.b16 %v166
    %v206 = vunpack.c.l.b16 %v167
    %v207 = vunpack.c.l.b16 %v168
    %v208 = vunpack.c.l.b16 %v169
    %v209 = vunpack.c.l.b16 %v170
    %v210 = vunpack.c.l.b16 %v171
    %v211 = vunpack.c.l.b16 %v172
    %v212 = vunpack.c.l.b16 %v173
    %v213 = vunpack.c.l.b16 %v174
    %v214 = vunpack.c.l.b16 %v175
    %v215 = vunpack.c.l.b16 %v176
    %v216 = vunpack.c.l.b16 %v177
    %v217 = vpack.c.b16 %v202, %v201
    %v218 = vpack.c.b16 %v204, %v203
    %v219 = vpack.c.b16 %v206, %v205
    %v220 = vpack.c.b16 %v208, %v207
    %v221 = vpack.c.b16 %v210, %v209
    %v222 = vpack.c.b16 %v212, %v211
    %v223 = vpack.c.b16 %v214, %v213
    %v224 = vpack.c.b16 %v216, %v215
    %233 = vmatprep.subr.bf16.mxu0 0
    %234 = vmatpush1.bf16.msra.mxu0 %v217
    %235 = vmatprep.subr.bf16.mxu0 0
    %236 = vmatpush1.bf16.msra.mxu0 %v218
    %237 = vmatprep.subr.bf16.mxu0 0
    %238 = vmatpush1.bf16.msra.mxu0 %v219
    %239 = vmatprep.subr.bf16.mxu0 0
    %240 = vmatpush1.bf16.msra.mxu0 %v220
    %241 = vmatprep.subr.bf16.mxu0 0
    %242 = vmatpush1.bf16.msra.mxu0 %v221
    %243 = vmatprep.subr.bf16.mxu0 0
    %244 = vmatpush1.bf16.msra.mxu0 %v222
    %245 = vmatprep.subr.bf16.mxu0 0
    %246 = vmatpush1.bf16.msra.mxu0 %v223
    %247 = vmatprep.subr.bf16.mxu0 0
    %248 = vmatpush1.bf16.msra.mxu0 %v224
    %249 = vmatprep.subr.bf16.mxu0 0
    %250 = vmatpush1.bf16.msra.mxu0 0
    %251 = vmatprep.subr.bf16.mxu0 0
    %252 = vmatpush1.bf16.msra.mxu0 0
    %253 = vmatprep.subr.bf16.mxu0 0
    %254 = vmatpush1.bf16.msra.mxu0 0
    %255 = vmatprep.subr.bf16.mxu0 0
    %256 = vmatpush1.bf16.msra.mxu0 0
    %257 = vmatprep.subr.bf16.mxu0 0
    %258 = vmatpush1.bf16.msra.mxu0 0
    %259 = vmatprep.subr.bf16.mxu0 0
    %260 = vmatpush1.bf16.msra.mxu0 0
    %261 = vmatprep.subr.bf16.mxu0 0
    %262 = vmatpush1.bf16.msra.mxu0 0
    %263 = vmatprep.subr.bf16.mxu0 0
    %264 = vmatpush1.bf16.msra.mxu0 0
    %265 = vmatprep.mubr.bf16.mxu0 0
    %266 = vmatmul.mubr.bf16.gmra.mrb[0].mxu0 %v161
    %v267 = vpop.f32.mrb[0].mxu0
    %v268 = vadd.f32 %v183, %v267
    %v269 = vpop.f32.mrb[0].mxu0
    %v270 = vpop.f32.mrb[0].mxu0
    %v271 = vpop.f32.mrb[0].mxu0
    %272 = vdwg.mxu0
    %v273 = vmax.f32 %v268, 0.0
    %v274 = vpack.c.bf16 %v273, %v273
    %v275 = vld [vmem:[#allocation8] sm:$0xf]
    %v276 = vld [vmem:[#allocation8 + $0x4] sm:$0xf]
    %v277 = vld [vmem:[#allocation8 + $0x8] sm:$0xf]
    %v278 = vld [vmem:[#allocation8 + $0xc] sm:$0xf]
    %v279 = vld [vmem:[#allocation8 + $0x10] sm:$0xf]
    %v280 = vld [vmem:[#allocation8 + $0x14] sm:$0xf]
    %v281 = vld [vmem:[#allocation8 + $0x18] sm:$0xf]
    %v282 = vld [vmem:[#allocation8 + $0x1c] sm:$0xf]
    %v283 = vld [vmem:[#allocation8 + $0x20] sm:$0xf]
    %v284 = vld [vmem:[#allocation8 + $0x24] sm:$0xf]
    %v285 = vld [vmem:[#allocation8 + $0x28] sm:$0xf]
    %v286 = vld [vmem:[#allocation8 + $0x2c] sm:$0xf]
    %v287 = vld [vmem:[#allocation8 + $0x30] sm:$0xf]
    %v288 = vld [vmem:[#allocation8 + $0x34] sm:$0xf]
    %v289 = vld [vmem:[#allocation8 + $0x38] sm:$0xf]
    %v290 = vld [vmem:[#allocation8 + $0x3c] sm:$0xf]
    %v291 = vld [vmem:[%s6] sm:$0x1]
    %v293 = vlaneseq
    %v294 = vshrl.u32 %v293, 7
    %v295 = vsub.s32 0, %v294
    %v296 = vrot.slane %v291, %v295
    %v314 = vunpack.c.l.b16 %v275
    %v315 = vunpack.c.l.b16 %v276
    %v316 = vunpack.c.l.b16 %v277
    %v317 = vunpack.c.l.b16 %v278
    %v318 = vunpack.c.l.b16 %v279
    %v319 = vunpack.c.l.b16 %v280
    %v320 = vunpack.c.l.b16 %v281
    %v321 = vunpack.c.l.b16 %v282
    %v322 = vunpack.c.l.b16 %v283
    %v323 = vunpack.c.l.b16 %v284
    %v324 = vunpack.c.l.b16 %v285
    %v325 = vunpack.c.l.b16 %v286
    %v326 = vunpack.c.l.b16 %v287
    %v327 = vunpack.c.l.b16 %v288
    %v328 = vunpack.c.l.b16 %v289
    %v329 = vunpack.c.l.b16 %v290
    %v330 = vpack.c.b16 %v315, %v314
    %v331 = vpack.c.b16 %v317, %v316
    %v332 = vpack.c.b16 %v319, %v318
    %v333 = vpack.c.b16 %v321, %v320
    %v334 = vpack.c.b16 %v323, %v322
    %v335 = vpack.c.b16 %v325, %v324
    %v336 = vpack.c.b16 %v327, %v326
    %v337 = vpack.c.b16 %v329, %v328
    %346 = vmatprep.subr.bf16.mxu0 0
    %347 = vmatpush1.bf16.msra.mxu0 %v330
    %348 = vmatprep.subr.bf16.mxu0 0
    %349 = vmatpush1.bf16.msra.mxu0 %v331
    %350 = vmatprep.subr.bf16.mxu0 0
    %351 = vmatpush1.bf16.msra.mxu0 %v332
    %352 = vmatprep.subr.bf16.mxu0 0
    %353 = vmatpush1.bf16.msra.mxu0 %v333
    %354 = vmatprep.subr.bf16.mxu0 0
    %355 = vmatpush1.bf16.msra.mxu0 %v334
    %356 = vmatprep.subr.bf16.mxu0 0
    %357 = vmatpush1.bf16.msra.mxu0 %v335
    %358 = vmatprep.subr.bf16.mxu0 0
    %359 = vmatpush1.bf16.msra.mxu0 %v336
    %360 = vmatprep.subr.bf16.mxu0 0
    %361 = vmatpush1.bf16.msra.mxu0 %v337
    %362 = vmatprep.subr.bf16.mxu0 0
    %363 = vmatpush1.bf16.msra.mxu0 0
    %364 = vmatprep.subr.bf16.mxu0 0
    %365 = vmatpush1.bf16.msra.mxu0 0
    %366 = vmatprep.subr.bf16.mxu0 0
    %367 = vmatpush1.bf16.msra.mxu0 0
    %368 = vmatprep.subr.bf16.mxu0 0
    %369 = vmatpush1.bf16.msra.mxu0 0
    %370 = vmatprep.subr.bf16.mxu0 0
    %371 = vmatpush1.bf16.msra.mxu0 0
    %372 = vmatprep.subr.bf16.mxu0 0
    %373 = vmatpush1.bf16.msra.mxu0 0
    %374 = vmatprep.subr.bf16.mxu0 0
    %375 = vmatpush1.bf16.msra.mxu0 0
    %376 = vmatprep.subr.bf16.mxu0 0
    %377 = vmatpush1.bf16.msra.mxu0 0
    %378 = vmatprep.mubr.bf16.mxu0 0
    %379 = vmatmul.mubr.bf16.gmra.mrb[0].mxu0 %v274
    %v380 = vpop.f32.mrb[0].mxu0
    %v381 = vadd.f32 %v296, %v380
    %v382 = vpop.f32.mrb[0].mxu0
    %v383 = vpop.f32.mrb[0].mxu0
    %v384 = vpop.f32.mrb[0].mxu0
    %385 = vdwg.mxu0
    %v386 = vmax.f32 %v381, 0.0
    %v387 = vpack.c.bf16 %v386, %v386
    %v388 = vld [vmem:[#allocation10] sm:$0xf]
    %v389 = vld [vmem:[#allocation10 + $0x4] sm:$0xf]
    %v390 = vld [vmem:[#allocation10 + $0x8] sm:$0xf]
    %v391 = vld [vmem:[#allocation10 + $0xc] sm:$0xf]
    %v392 = vld [vmem:[#allocation10 + $0x10] sm:$0xf]
    %v393 = vld [vmem:[#allocation10 + $0x14] sm:$0xf]
    %v394 = vld [vmem:[#allocation10 + $0x18] sm:$0xf]
    %v395 = vld [vmem:[#allocation10 + $0x1c] sm:$0xf]
    %v396 = vld [vmem:[#allocation10 + $0x20] sm:$0xf]
    %v397 = vld [vmem:[#allocation10 + $0x24] sm:$0xf]
    %v398 = vld [vmem:[#allocation10 + $0x28] sm:$0xf]
    %v399 = vld [vmem:[#allocation10 + $0x2c] sm:$0xf]
    %v400 = vld [vmem:[#allocation10 + $0x30] sm:$0xf]
    %v401 = vld [vmem:[#allocation10 + $0x34] sm:$0xf]
    %v402 = vld [vmem:[#allocation10 + $0x38] sm:$0xf]
    %v403 = vld [vmem:[#allocation10 + $0x3c] sm:$0xf]
    %v404 = vld [vmem:[%s8] sm:$0x1]
    %v406 = vlaneseq
    %v407 = vshrl.u32 %v406, 7
    %v408 = vsub.s32 0, %v407
    %v409 = vrot.slane %v404, %v408
    %v427 = vunpack.c.l.b16 %v388
    %v428 = vunpack.c.l.b16 %v389
    %v429 = vunpack.c.l.b16 %v390
    %v430 = vunpack.c.l.b16 %v391
    %v431 = vunpack.c.l.b16 %v392
    %v432 = vunpack.c.l.b16 %v393
    %v433 = vunpack.c.l.b16 %v394
    %v434 = vunpack.c.l.b16 %v395
    %v435 = vunpack.c.l.b16 %v396
    %v436 = vunpack.c.l.b16 %v397
    %v437 = vunpack.c.l.b16 %v398
    %v438 = vunpack.c.l.b16 %v399
    %v439 = vunpack.c.l.b16 %v400
    %v440 = vunpack.c.l.b16 %v401
    %v441 = vunpack.c.l.b16 %v402
    %v442 = vunpack.c.l.b16 %v403
    %v443 = vpack.c.b16 %v428, %v427
    %v444 = vpack.c.b16 %v430, %v429
    %v445 = vpack.c.b16 %v432, %v431
    %v446 = vpack.c.b16 %v434, %v433
    %v447 = vpack.c.b16 %v436, %v435
    %v448 = vpack.c.b16 %v438, %v437
    %v449 = vpack.c.b16 %v440, %v439
    %v450 = vpack.c.b16 %v442, %v441
    %459 = vmatprep.subr.bf16.mxu0 0
    %460 = vmatpush1.bf16.msra.mxu0 %v443
    %461 = vmatprep.subr.bf16.mxu0 0
    %462 = vmatpush1.bf16.msra.mxu0 %v444
    %463 = vmatprep.subr.bf16.mxu0 0
    %464 = vmatpush1.bf16.msra.mxu0 %v445
    %465 = vmatprep.subr.bf16.mxu0 0
    %466 = vmatpush1.bf16.msra.mxu0 %v446
    %467 = vmatprep.subr.bf16.mxu0 0
    %468 = vmatpush1.bf16.msra.mxu0 %v447
    %469 = vmatprep.subr.bf16.mxu0 0
    %470 = vmatpush1.bf16.msra.mxu0 %v448
    %471 = vmatprep.subr.bf16.mxu0 0
    %472 = vmatpush1.bf16.msra.mxu0 %v449
    %473 = vmatprep.subr.bf16.mxu0 0
    %474 = vmatpush1.bf16.msra.mxu0 %v450
    %475 = vmatprep.subr.bf16.mxu0 0
    %476 = vmatpush1.bf16.msra.mxu0 0
    %477 = vmatprep.subr.bf16.mxu0 0
    %478 = vmatpush1.bf16.msra.mxu0 0
    %479 = vmatprep.subr.bf16.mxu0 0
    %480 = vmatpush1.bf16.msra.mxu0 0
    %481 = vmatprep.subr.bf16.mxu0 0
    %482 = vmatpush1.bf16.msra.mxu0 0
    %483 = vmatprep.subr.bf16.mxu0 0
    %484 = vmatpush1.bf16.msra.mxu0 0
    %485 = vmatprep.subr.bf16.mxu0 0
    %486 = vmatpush1.bf16.msra.mxu0 0
    %487 = vmatprep.subr.bf16.mxu0 0
    %488 = vmatpush1.bf16.msra.mxu0 0
    %489 = vmatprep.subr.bf16.mxu0 0
    %490 = vmatpush1.bf16.msra.mxu0 0
    %491 = vmatprep.mubr.bf16.mxu0 0
    %492 = vmatmul.mubr.bf16.gmra.mrb[0].mxu0 %v387
    %v493 = vpop.f32.mrb[0].mxu0
    %v494 = vadd.f32 %v409, %v493
    %v495 = vpop.f32.mrb[0].mxu0
    %v496 = vpop.f32.mrb[0].mxu0
    %v497 = vpop.f32.mrb[0].mxu0
    %498 = vdwg.mxu0
    %v499 = vpack.c.bf16 %v494, %v494
    %500 = vst [vmem:[#allocation11] sm:$0xf] %v499
    // Predicated region
    $region58: #{_run_kernel.1} parent=1 // pred_check
      _
    $region59: #{_run_kernel.1} parent=1 // pred_check_branch
      %502 = sbr.rel (0) target = $region61
    $region60: #{_run_kernel.1} parent=1 // pred_region
      %s504 = ssub.s32 64, 64
      %505 = vsyncadd [#allocation4], %s504
      %s507 = sshll.u32 [#allocation11], 4
      %s508 = int_to_ptr.vmem [resolvable:$true] %s507
      %510 = dma.vmem_to_hbm [thread:$0]  %s508, 64, %s9, [#allocation4]
    $region61: #{_run_kernel.1} parent=1 // pred_fallthru
      _
    // Predicated region
    $region62: #{_run_kernel.1} parent=1 // pred_check
      _
    $region63: #{_run_kernel.1} parent=1 // pred_check_branch
      %512 = sbr.rel (0) target = $region65
    $region64: #{_run_kernel.1} parent=1 // pred_region
      %513 = dma.done [#allocation4], 64
    $region65: #{_run_kernel.1} parent=1 // pred_fallthru
      _
    %514 = vsyncpa [#allocation3], 1
    %515 = vsyncpa [#allocation6], 1
    %516 = vsyncpa [#allocation9], 1
    %517 = vsyncpa [#allocation4], 1

</llo_original>
